<compile_context>
chip_gen: v6e
topology: v6e:2x2x1
jax: 0.10.0
libtpu: 0.0.40
codegen_flags: <defaults>
</compile_context>

<pallas_src>
import functools
import math

import jax
import jax.numpy as jnp
from jax import lax
from jax.experimental import pallas as pl
from jax.experimental.pallas import tpu as pltpu


def _round_up(x: int, m: int) -> int:
    return ((x + m - 1) // m) * m


# --------------------------------------------------------------------------- #
# Kernel 1: LayerNorm + fused QKV projection over a row tile of (B*T, D).
# --------------------------------------------------------------------------- #
def _ln_qkv_kernel(x_ref, g_ref, b_ref, wqkv_ref, bqkv_ref, qkv_ref, *, eps: float):
    """x_ref: (rows, D) f32; wqkv_ref: (D, 3D) bf16 (1/sqrt(hd) folded into Q cols);
    qkv_ref: (rows, 3D) bf16 output."""
    x = x_ref[...]                                             # (rows, D) f32
    mean = jnp.mean(x, axis=-1, keepdims=True)
    var = jnp.mean(jnp.square(x - mean), axis=-1, keepdims=True)
    norm = (x - mean) * lax.rsqrt(var + eps)
    norm = norm * g_ref[...] + b_ref[...]                      # (rows, D) f32

    qkv = jnp.dot(norm.astype(jnp.bfloat16), wqkv_ref[...],
                  preferred_element_type=jnp.float32) + bqkv_ref[...]
    qkv_ref[...] = qkv.astype(qkv_ref.dtype)                   # bf16 out (half HBM traffic)


# --------------------------------------------------------------------------- #
# Kernel 2: per-batch attention over all heads + ONE full-width out-projection
#           (+ bias + residual).  ctx is staged per head into a (T, D) bf16 VMEM
#           scratch so the out-proj contraction is K = D (full MXU width) and is
#           issued once per batch element instead of H times with K = head_dim.
# --------------------------------------------------------------------------- #
def _attn_out_kernel(qkv_ref, x_ref, wo_ref, bo_ref, o_ref, ctx_ref,
                     *, num_heads: int, head_dim: int):
    """qkv_ref: (1, T, 3D) bf16; x_ref: (1, T, D) f32 residual; wo_ref: (D, D) bf16;
    bo_ref: (1, D) f32; ctx_ref: (T, D) bf16 VMEM scratch."""
    D = num_heads * head_dim
    qkv = qkv_ref[0]                                           # (T, 3D) bf16

    for h in range(num_heads):                                 # static, unrolled
        q = qkv[:, h * head_dim:(h + 1) * head_dim]            # (T, hd) (scale pre-folded)
        k = qkv[:, D + h * head_dim:D + (h + 1) * head_dim]    # (T, hd)
        v = qkv[:, 2 * D + h * head_dim:2 * D + (h + 1) * head_dim]

        # scores: contract head dims of q and k (no explicit transpose needed).
        s = lax.dot_general(q, k, (((1,), (1,)), ((), ())),
                            preferred_element_type=jnp.float32)      # (T, T) f32
        s = s - jnp.max(s, axis=-1, keepdims=True)
        p = jnp.exp(s)                                               # f32
        denom = jnp.sum(p, axis=-1, keepdims=True)                   # (T, 1) f32

        ctx = jnp.dot(p.astype(jnp.bfloat16), v,
                      preferred_element_type=jnp.float32)            # (T, hd) f32
        # normalize after PV (T*hd elems, not T*T) with the EUP approximate reciprocal.
        ctx = ctx * pl.reciprocal(denom, approx=True)
        ctx_ref[:, h * head_dim:(h + 1) * head_dim] = ctx.astype(jnp.bfloat16)

    # Single full-width out-projection (K = D), fused with bias + residual.
    out = jnp.dot(ctx_ref[...], wo_ref[...], preferred_element_type=jnp.float32)
    o_ref[0] = (x_ref[0] + out + bo_ref[...]).astype(o_ref.dtype)


# --------------------------------------------------------------------------- #
# Host-side parameter preparation (done once, outside the per-call path):
# transpose weights to (D_in, D_out), fold 1/sqrt(hd) into the Q slice, cast bf16.
# --------------------------------------------------------------------------- #
def prepare_params(params, num_heads: int):
    gamma, beta, w_in, b_in, w_out, b_out = params   # torch layout: (out, in)
    D = gamma.shape[0]
    assert D % num_heads == 0
    hd = D // num_heads
    scale = 1.0 / math.sqrt(hd)

    col_scale = jnp.concatenate(
        [jnp.full((D,), scale, jnp.float32), jnp.ones((2 * D,), jnp.float32)])
    wqkv = (w_in.T * col_scale[None, :]).astype(jnp.bfloat16)          # (D, 3D) bf16
    bqkv = (b_in.astype(jnp.float32) * col_scale).reshape(1, 3 * D)    # (1, 3D) f32
    wo = w_out.T.astype(jnp.bfloat16)                                  # (D, D) bf16
    bo = b_out.reshape(1, D).astype(jnp.float32)                       # (1, D) f32
    return (gamma.reshape(1, D).astype(jnp.float32),
            beta.reshape(1, D).astype(jnp.float32), wqkv, bqkv, wo, bo)


def self_attention_block(x, prepared, *, num_heads: int, eps: float = 1e-5):
    B, T, D = x.shape
    H = num_heads
    assert D % H == 0
    hd = D // H
    gamma2, beta2, wqkv, bqkv, wo, bo = prepared

    # ---- kernel 1: LN + QKV projection over row tiles of the flattened slab ----
    rows = B * T
    blk = min(512, _round_up(rows, 8))
    padded_rows = _round_up(rows, blk)
    x_flat = x.reshape(rows, D)
    if padded_rows != rows:
        x_flat = jnp.pad(x_flat, ((0, padded_rows - rows), (0, 0)))

    qkv = pl.pallas_call(
        functools.partial(_ln_qkv_kernel, eps=eps),
        out_shape=jax.ShapeDtypeStruct((padded_rows, 3 * D), jnp.bfloat16),
        grid=(padded_rows // blk,),
        in_specs=[
            pl.BlockSpec((blk, D), lambda i: (i, 0)),
            pl.BlockSpec((1, D), lambda i: (0, 0)),
            pl.BlockSpec((1, D), lambda i: (0, 0)),
            pl.BlockSpec((D, 3 * D), lambda i: (0, 0)),
            pl.BlockSpec((1, 3 * D), lambda i: (0, 0)),
        ],
        out_specs=pl.BlockSpec((blk, 3 * D), lambda i: (i, 0)),
        compiler_params=pltpu.CompilerParams(dimension_semantics=("parallel",)),
    )(x_flat, gamma2, beta2, wqkv, bqkv)

    # (B*T, 3D) -> (B, T, 3D) is a bitcast (no transpose, no extra HBM pass);
    # heads are sliced inside kernel 2 instead of re-laid out on the host.
    if padded_rows != rows:
        qkv = qkv[:rows]
    qkv = qkv.reshape(B, T, 3 * D)

    # ---- kernel 2: attention + fused full-width out-projection + residual ----
    out = pl.pallas_call(
        functools.partial(_attn_out_kernel, num_heads=H, head_dim=hd),
        out_shape=jax.ShapeDtypeStruct((B, T, D), x.dtype),
        grid=(B,),
        in_specs=[
            pl.BlockSpec((1, T, 3 * D), lambda b: (b, 0, 0)),   # qkv (all heads)
            pl.BlockSpec((1, T, D), lambda b: (b, 0, 0)),       # residual x
            pl.BlockSpec((D, D), lambda b: (0, 0)),             # Wo (resident)
            pl.BlockSpec((1, D), lambda b: (0, 0)),             # out bias
        ],
        out_specs=pl.BlockSpec((1, T, D), lambda b: (b, 0, 0)),
        scratch_shapes=[pltpu.VMEM((T, D), jnp.bfloat16)],      # staged ctx (all heads)
        compiler_params=pltpu.CompilerParams(dimension_semantics=("parallel",)),
    )(qkv, x, wo, bo)
    return out


# --------------------------------------------------------------------------- #
# Pure-JAX reference (mirrors nn.LayerNorm + nn.MultiheadAttention, batch_first).
# --------------------------------------------------------------------------- #
def _reference(x, params, num_heads, eps=1e-5):
    gamma, beta, w_in, b_in, w_out, b_out = params
    B, T, D = x.shape
    hd = D // num_heads
    mean = jnp.mean(x, axis=-1, keepdims=True)
    var = jnp.mean(jnp.square(x - mean), axis=-1, keepdims=True)
    n = (x - mean) / jnp.sqrt(var + eps) * gamma + beta
    qkv = jnp.einsum('btd,ed->bte', n, w_in) + b_in                    # (B, T, 3D)
    q, k, v = jnp.split(qkv, 3, axis=-1)
    q = q.reshape(B, T, num_heads, hd).transpose(0, 2, 1, 3)
    k = k.reshape(B, T, num_heads, hd).transpose(0, 2, 1, 3)
    v = v.reshape(B, T, num_heads, hd).transpose(0, 2, 1, 3)
    s = jnp.einsum('bhqd,bhkd->bhqk', q, k) / math.sqrt(hd)
    p = jax.nn.softmax(s, axis=-1)
    ctx = jnp.einsum('bhqk,bhkd->bhqd', p, v).transpose(0, 2, 1, 3).reshape(B, T, D)
    out = jnp.einsum('btd,ed->bte', ctx, w_out) + b_out
    return x + out


if __name__ == "__main__":
    B, T, D, H = 2, 8, 32, 4

    key = jax.random.PRNGKey(0)
    kx, kg, kb, kwi, kbi, kwo, kbo = jax.random.split(key, 7)

    x = jax.random.normal(kx, (B, T, D), dtype=jnp.float32)

    # Synthetic parameters (shapes follow nn.LayerNorm / nn.MultiheadAttention).
    gamma = 1.0 + 0.1 * jax.random.normal(kg, (D,), dtype=jnp.float32)
    beta = 0.1 * jax.random.normal(kb, (D,), dtype=jnp.float32)
    w_in = jax.random.normal(kwi, (3 * D, D), dtype=jnp.float32) / math.sqrt(D)
    b_in = 0.1 * jax.random.normal(kbi, (3 * D,), dtype=jnp.float32)
    w_out = jax.random.normal(kwo, (D, D), dtype=jnp.float32) / math.sqrt(D)
    b_out = 0.1 * jax.random.normal(kbo, (D,), dtype=jnp.float32)
    params = (gamma, beta, w_in, b_in, w_out, b_out)

    prepared = prepare_params(params, H)          # once, outside the per-call path
    fwd = jax.jit(functools.partial(self_attention_block, num_heads=H))

    out = jax.block_until_ready(fwd(x, prepared))

    ref = _reference(x, params, H)
    assert out.shape == (B, T, D)
    max_err = float(jnp.max(jnp.abs(out - ref)))
    # bf16 MXU operands + EUP approx reciprocal -> ~1e-2 level agreement vs f32 ref.
    assert jnp.allclose(out, ref, atol=5e-2, rtol=5e-2), f"mismatch vs reference (max|diff|={max_err})"

    print("KERNEL_OK")
</pallas_src>

<mosaic_0001>
module attributes {stable_mosaic.version = 11 : i64} {
  func.func @_ln_qkv_kernel(%arg0: i32, %arg1: memref<16x32xf32, #tpu.memory_space<vmem>>, %arg2: memref<1x32xf32, #tpu.memory_space<vmem>>, %arg3: memref<1x32xf32, #tpu.memory_space<vmem>>, %arg4: memref<32x96xbf16, #tpu.memory_space<vmem>>, %arg5: memref<1x96xf32, #tpu.memory_space<vmem>>, %arg6: memref<16x96xbf16, #tpu.memory_space<vmem>>) attributes {dimension_semantics = [#tpu.dimension_semantics<parallel>], iteration_bounds = array<i64: 1>, scalar_prefetch = 0 : i64, scratch_operands = 0 : i64, tpu.core_type = #tpu.core_type<tc>, window_params = [{transform_indices = @transform_0, window_bounds = array<i64: 16, 32>}, {pipeline_mode = #tpu.pipeline_mode<synchronous>, transform_indices = @transform_1, window_bounds = array<i64: 1, 32>}, {pipeline_mode = #tpu.pipeline_mode<synchronous>, transform_indices = @transform_2, window_bounds = array<i64: 1, 32>}, {pipeline_mode = #tpu.pipeline_mode<synchronous>, transform_indices = @transform_3, window_bounds = array<i64: 32, 96>}, {pipeline_mode = #tpu.pipeline_mode<synchronous>, transform_indices = @transform_4, window_bounds = array<i64: 1, 96>}, {transform_indices = @transform_5, window_bounds = array<i64: 16, 96>}]} {
    %c0 = arith.constant 0 : index
    %c0_0 = arith.constant 0 : index
    %0 = vector.load %arg1[%c0, %c0_0] : memref<16x32xf32, #tpu.memory_space<vmem>>, vector<16x32xf32>
    %cst = arith.constant dense<0.000000e+00> : vector<16xf32>
    %1 = vector.multi_reduction <add>, %0, %cst [1] : vector<16x32xf32> to vector<16xf32>
    %2 = vector.shape_cast %1 : vector<16xf32> to vector<16x1xf32>
    %cst_1 = arith.constant 3.200000e+01 : f32
    %3 = vector.broadcast %cst_1 : f32 to vector<16x1xf32>
    %4 = arith.divf %2, %3 : vector<16x1xf32>
    %5 = vector.broadcast %4 : vector<16x1xf32> to vector<16x32xf32>
    %6 = arith.subf %0, %5 : vector<16x32xf32>
    %7 = arith.mulf %6, %6 : vector<16x32xf32>
    %cst_2 = arith.constant dense<0.000000e+00> : vector<16xf32>
    %8 = vector.multi_reduction <add>, %7, %cst_2 [1] : vector<16x32xf32> to vector<16xf32>
    %9 = vector.shape_cast %8 : vector<16xf32> to vector<16x1xf32>
    %cst_3 = arith.constant 3.200000e+01 : f32
    %10 = vector.broadcast %cst_3 : f32 to vector<16x1xf32>
    %11 = arith.divf %9, %10 : vector<16x1xf32>
    %12 = vector.broadcast %4 : vector<16x1xf32> to vector<16x32xf32>
    %13 = arith.subf %0, %12 : vector<16x32xf32>
    %cst_4 = arith.constant 9.99999974E-6 : f32
    %14 = vector.broadcast %cst_4 : f32 to vector<16x1xf32>
    %15 = arith.addf %11, %14 : vector<16x1xf32>
    %16 = math.rsqrt %15 : vector<16x1xf32>
    %17 = vector.broadcast %16 : vector<16x1xf32> to vector<16x32xf32>
    %18 = arith.mulf %13, %17 : vector<16x32xf32>
    %c0_5 = arith.constant 0 : index
    %c0_6 = arith.constant 0 : index
    %19 = vector.load %arg2[%c0_5, %c0_6] : memref<1x32xf32, #tpu.memory_space<vmem>>, vector<1x32xf32>
    %20 = vector.broadcast %19 : vector<1x32xf32> to vector<16x32xf32>
    %21 = arith.mulf %18, %20 : vector<16x32xf32>
    %c0_7 = arith.constant 0 : index
    %c0_8 = arith.constant 0 : index
    %22 = vector.load %arg3[%c0_7, %c0_8] : memref<1x32xf32, #tpu.memory_space<vmem>>, vector<1x32xf32>
    %23 = vector.broadcast %22 : vector<1x32xf32> to vector<16x32xf32>
    %24 = arith.addf %21, %23 : vector<16x32xf32>
    %25 = arith.truncf %24 : vector<16x32xf32> to vector<16x32xbf16>
    %c0_9 = arith.constant 0 : index
    %c0_10 = arith.constant 0 : index
    %26 = vector.load %arg4[%c0_9, %c0_10] : memref<32x96xbf16, #tpu.memory_space<vmem>>, vector<32x96xbf16>
    %cst_11 = arith.constant dense<0.000000e+00> : vector<16x96xf32>
    %27 = tpu.matmul %25, %26, %cst_11 {dimension_numbers = #tpu.dot_dimension_numbers<[1], [0], [0], [1], [0, 0, 1, 1], [], []>} : vector<16x32xbf16>, vector<32x96xbf16>, vector<16x96xf32> -> vector<16x96xf32>
    %c0_12 = arith.constant 0 : index
    %c0_13 = arith.constant 0 : index
    %28 = vector.load %arg5[%c0_12, %c0_13] : memref<1x96xf32, #tpu.memory_space<vmem>>, vector<1x96xf32>
    %29 = vector.broadcast %28 : vector<1x96xf32> to vector<16x96xf32>
    %30 = arith.addf %27, %29 : vector<16x96xf32>
    %31 = arith.truncf %30 : vector<16x96xf32> to vector<16x96xbf16>
    %c0_14 = arith.constant 0 : index
    %c0_15 = arith.constant 0 : index
    %32 = vector.load %arg6[%c0_14, %c0_15] : memref<16x96xbf16, #tpu.memory_space<vmem>>, vector<16x96xbf16>
    tpu.vector_store %arg6[%c0_14, %c0_15], %31 {strides = array<i32>} : memref<16x96xbf16, #tpu.memory_space<vmem>>, vector<16x96xbf16>,
    return
  }
  func.func @transform_0(%arg0: i32) -> (i32, i32) {
    %c0_i32 = arith.constant 0 : i32
    %c0_i32_0 = arith.constant 0 : i32
    return %arg0, %c0_i32 : i32, i32
  }
  func.func @transform_1(%arg0: i32) -> (i32, i32) {
    %c0_i32 = arith.constant 0 : i32
    %c0_i32_0 = arith.constant 0 : i32
    %c0_i32_1 = arith.constant 0 : i32
    return %c0_i32, %c0_i32_0 : i32, i32
  }
  func.func @transform_2(%arg0: i32) -> (i32, i32) {
    %c0_i32 = arith.constant 0 : i32
    %c0_i32_0 = arith.constant 0 : i32
    %c0_i32_1 = arith.constant 0 : i32
    return %c0_i32, %c0_i32_0 : i32, i32
  }
  func.func @transform_3(%arg0: i32) -> (i32, i32) {
    %c0_i32 = arith.constant 0 : i32
    %c0_i32_0 = arith.constant 0 : i32
    %c0_i32_1 = arith.constant 0 : i32
    return %c0_i32, %c0_i32_0 : i32, i32
  }
  func.func @transform_4(%arg0: i32) -> (i32, i32) {
    %c0_i32 = arith.constant 0 : i32
    %c0_i32_0 = arith.constant 0 : i32
    %c0_i32_1 = arith.constant 0 : i32
    return %c0_i32, %c0_i32_0 : i32, i32
  }
  func.func @transform_5(%arg0: i32) -> (i32, i32) {
    %c0_i32 = arith.constant 0 : i32
    %c0_i32_0 = arith.constant 0 : i32
    return %arg0, %c0_i32 : i32, i32
  }
}

module attributes {stable_mosaic.version = 11 : i64} {
  func.func @_attn_out_kernel(%arg0: i32, %arg1: memref<1x8x96xbf16, #tpu.memory_space<vmem>>, %arg2: memref<1x8x32xf32, #tpu.memory_space<vmem>>, %arg3: memref<32x32xbf16, #tpu.memory_space<vmem>>, %arg4: memref<1x32xf32, #tpu.memory_space<vmem>>, %arg5: memref<1x8x32xf32, #tpu.memory_space<vmem>>, %arg6: memref<8x32xbf16, #tpu.memory_space<vmem>>) attributes {dimension_semantics = [#tpu.dimension_semantics<parallel>], iteration_bounds = array<i64: 2>, scalar_prefetch = 0 : i64, scratch_operands = 1 : i64, tpu.core_type = #tpu.core_type<tc>, window_params = [{transform_indices = @transform_0, window_bounds = array<i64: 1, 8, 96>}, {transform_indices = @transform_1, window_bounds = array<i64: 1, 8, 32>}, {pipeline_mode = #tpu.pipeline_mode<synchronous>, transform_indices = @transform_2, window_bounds = array<i64: 32, 32>}, {pipeline_mode = #tpu.pipeline_mode<synchronous>, transform_indices = @transform_3, window_bounds = array<i64: 1, 32>}, {transform_indices = @transform_4, window_bounds = array<i64: 1, 8, 32>}]} {
    %c0 = arith.constant 0 : index
    %c0_0 = arith.constant 0 : index
    %c0_1 = arith.constant 0 : index
    %0 = vector.load %arg1[%c0, %c0_0, %c0_1] : memref<1x8x96xbf16, #tpu.memory_space<vmem>>, vector<1x8x96xbf16>
    %1 = vector.shape_cast %0 : vector<1x8x96xbf16> to vector<8x96xbf16>
    %2 = vector.extract_strided_slice %1 {offsets = [0, 0], sizes = [8, 8], strides = [1, 1]} : vector<8x96xbf16> to vector<8x8xbf16>
    %3 = vector.extract_strided_slice %1 {offsets = [0, 32], sizes = [8, 8], strides = [1, 1]} : vector<8x96xbf16> to vector<8x8xbf16>
    %4 = vector.extract_strided_slice %1 {offsets = [0, 64], sizes = [8, 8], strides = [1, 1]} : vector<8x96xbf16> to vector<8x8xbf16>
    %cst = arith.constant dense<0.000000e+00> : vector<8x8xf32>
    %5 = tpu.matmul %2, %3, %cst {dimension_numbers = #tpu.dot_dimension_numbers<[1], [1], [0], [0], [0, 0, 1, 0], [], []>} : vector<8x8xbf16>, vector<8x8xbf16>, vector<8x8xf32> -> vector<8x8xf32>
    %cst_2 = arith.constant dense<0xFF800000> : vector<8xf32>
    %6 = vector.multi_reduction <maximumf>, %5, %cst_2 [1] : vector<8x8xf32> to vector<8xf32>
    %7 = vector.shape_cast %6 : vector<8xf32> to vector<8x1xf32>
    %8 = vector.broadcast %7 : vector<8x1xf32> to vector<8x8xf32>
    %9 = arith.subf %5, %8 : vector<8x8xf32>
    %10 = math.exp %9 : vector<8x8xf32>
    %cst_3 = arith.constant dense<0.000000e+00> : vector<8xf32>
    %11 = vector.multi_reduction <add>, %10, %cst_3 [1] : vector<8x8xf32> to vector<8xf32>
    %12 = vector.shape_cast %11 : vector<8xf32> to vector<8x1xf32>
    %13 = arith.truncf %10 : vector<8x8xf32> to vector<8x8xbf16>
    %cst_4 = arith.constant dense<0.000000e+00> : vector<8x8xf32>
    %14 = tpu.matmul %13, %4, %cst_4 {dimension_numbers = #tpu.dot_dimension_numbers<[1], [0], [0], [1], [0, 0, 1, 1], [], []>} : vector<8x8xbf16>, vector<8x8xbf16>, vector<8x8xf32> -> vector<8x8xf32>
    %15 = tpu.reciprocal %12 {approx = true} : vector<8x1xf32> -> vector<8x1xf32>
    %16 = vector.broadcast %15 : vector<8x1xf32> to vector<8x8xf32>
    %17 = arith.mulf %14, %16 : vector<8x8xf32>
    %18 = arith.truncf %17 : vector<8x8xf32> to vector<8x8xbf16>
    %c0_5 = arith.constant 0 : index
    %c0_6 = arith.constant 0 : index
    %19 = vector.load %arg6[%c0_5, %c0_6] : memref<8x32xbf16, #tpu.memory_space<vmem>>, vector<8x8xbf16>
    tpu.vector_store %arg6[%c0_5, %c0_6], %18 {strides = array<i32>} : memref<8x32xbf16, #tpu.memory_space<vmem>>, vector<8x8xbf16>,
    %20 = vector.extract_strided_slice %1 {offsets = [0, 8], sizes = [8, 8], strides = [1, 1]} : vector<8x96xbf16> to vector<8x8xbf16>
    %21 = vector.extract_strided_slice %1 {offsets = [0, 40], sizes = [8, 8], strides = [1, 1]} : vector<8x96xbf16> to vector<8x8xbf16>
    %22 = vector.extract_strided_slice %1 {offsets = [0, 72], sizes = [8, 8], strides = [1, 1]} : vector<8x96xbf16> to vector<8x8xbf16>
    %cst_7 = arith.constant dense<0.000000e+00> : vector<8x8xf32>
    %23 = tpu.matmul %20, %21, %cst_7 {dimension_numbers = #tpu.dot_dimension_numbers<[1], [1], [0], [0], [0, 0, 1, 0], [], []>} : vector<8x8xbf16>, vector<8x8xbf16>, vector<8x8xf32> -> vector<8x8xf32>
    %cst_8 = arith.constant dense<0xFF800000> : vector<8xf32>
    %24 = vector.multi_reduction <maximumf>, %23, %cst_8 [1] : vector<8x8xf32> to vector<8xf32>
    %25 = vector.shape_cast %24 : vector<8xf32> to vector<8x1xf32>
    %26 = vector.broadcast %25 : vector<8x1xf32> to vector<8x8xf32>
    %27 = arith.subf %23, %26 : vector<8x8xf32>
    %28 = math.exp %27 : vector<8x8xf32>
    %cst_9 = arith.constant dense<0.000000e+00> : vector<8xf32>
    %29 = vector.multi_reduction <add>, %28, %cst_9 [1] : vector<8x8xf32> to vector<8xf32>
    %30 = vector.shape_cast %29 : vector<8xf32> to vector<8x1xf32>
    %31 = arith.truncf %28 : vector<8x8xf32> to vector<8x8xbf16>
    %cst_10 = arith.constant dense<0.000000e+00> : vector<8x8xf32>
    %32 = tpu.matmul %31, %22, %cst_10 {dimension_numbers = #tpu.dot_dimension_numbers<[1], [0], [0], [1], [0, 0, 1, 1], [], []>} : vector<8x8xbf16>, vector<8x8xbf16>, vector<8x8xf32> -> vector<8x8xf32>
    %33 = tpu.reciprocal %30 {approx = true} : vector<8x1xf32> -> vector<8x1xf32>
    %34 = vector.broadcast %33 : vector<8x1xf32> to vector<8x8xf32>
    %35 = arith.mulf %32, %34 : vector<8x8xf32>
    %36 = arith.truncf %35 : vector<8x8xf32> to vector<8x8xbf16>
    %c0_11 = arith.constant 0 : index
    %c8 = arith.constant 8 : index
    %37 = vector.load %arg6[%c0_11, %c8] : memref<8x32xbf16, #tpu.memory_space<vmem>>, vector<8x8xbf16>
    tpu.vector_store %arg6[%c0_11, %c8], %36 {strides = array<i32>} : memref<8x32xbf16, #tpu.memory_space<vmem>>, vector<8x8xbf16>,
    %38 = vector.extract_strided_slice %1 {offsets = [0, 16], sizes = [8, 8], strides = [1, 1]} : vector<8x96xbf16> to vector<8x8xbf16>
    %39 = vector.extract_strided_slice %1 {offsets = [0, 48], sizes = [8, 8], strides = [1, 1]} : vector<8x96xbf16> to vector<8x8xbf16>
    %40 = vector.extract_strided_slice %1 {offsets = [0, 80], sizes = [8, 8], strides = [1, 1]} : vector<8x96xbf16> to vector<8x8xbf16>
    %cst_12 = arith.constant dense<0.000000e+00> : vector<8x8xf32>
    %41 = tpu.matmul %38, %39, %cst_12 {dimension_numbers = #tpu.dot_dimension_numbers<[1], [1], [0], [0], [0, 0, 1, 0], [], []>} : vector<8x8xbf16>, vector<8x8xbf16>, vector<8x8xf32> -> vector<8x8xf32>
    %cst_13 = arith.constant dense<0xFF800000> : vector<8xf32>
    %42 = vector.multi_reduction <maximumf>, %41, %cst_13 [1] : vector<8x8xf32> to vector<8xf32>
    %43 = vector.shape_cast %42 : vector<8xf32> to vector<8x1xf32>
    %44 = vector.broadcast %43 : vector<8x1xf32> to vector<8x8xf32>
    %45 = arith.subf %41, %44 : vector<8x8xf32>
    %46 = math.exp %45 : vector<8x8xf32>
    %cst_14 = arith.constant dense<0.000000e+00> : vector<8xf32>
    %47 = vector.multi_reduction <add>, %46, %cst_14 [1] : vector<8x8xf32> to vector<8xf32>
    %48 = vector.shape_cast %47 : vector<8xf32> to vector<8x1xf32>
    %49 = arith.truncf %46 : vector<8x8xf32> to vector<8x8xbf16>
    %cst_15 = arith.constant dense<0.000000e+00> : vector<8x8xf32>
    %50 = tpu.matmul %49, %40, %cst_15 {dimension_numbers = #tpu.dot_dimension_numbers<[1], [0], [0], [1], [0, 0, 1, 1], [], []>} : vector<8x8xbf16>, vector<8x8xbf16>, vector<8x8xf32> -> vector<8x8xf32>
    %51 = tpu.reciprocal %48 {approx = true} : vector<8x1xf32> -> vector<8x1xf32>
    %52 = vector.broadcast %51 : vector<8x1xf32> to vector<8x8xf32>
    %53 = arith.mulf %50, %52 : vector<8x8xf32>
    %54 = arith.truncf %53 : vector<8x8xf32> to vector<8x8xbf16>
    %c0_16 = arith.constant 0 : index
    %c16 = arith.constant 16 : index
    %55 = vector.load %arg6[%c0_16, %c16] : memref<8x32xbf16, #tpu.memory_space<vmem>>, vector<8x8xbf16>
    tpu.vector_store %arg6[%c0_16, %c16], %54 {strides = array<i32>} : memref<8x32xbf16, #tpu.memory_space<vmem>>, vector<8x8xbf16>,
    %56 = vector.extract_strided_slice %1 {offsets = [0, 24], sizes = [8, 8], strides = [1, 1]} : vector<8x96xbf16> to vector<8x8xbf16>
    %57 = vector.extract_strided_slice %1 {offsets = [0, 56], sizes = [8, 8], strides = [1, 1]} : vector<8x96xbf16> to vector<8x8xbf16>
    %58 = vector.extract_strided_slice %1 {offsets = [0, 88], sizes = [8, 8], strides = [1, 1]} : vector<8x96xbf16> to vector<8x8xbf16>
    %cst_17 = arith.constant dense<0.000000e+00> : vector<8x8xf32>
    %59 = tpu.matmul %56, %57, %cst_17 {dimension_numbers = #tpu.dot_dimension_numbers<[1], [1], [0], [0], [0, 0, 1, 0], [], []>} : vector<8x8xbf16>, vector<8x8xbf16>, vector<8x8xf32> -> vector<8x8xf32>
    %cst_18 = arith.constant dense<0xFF800000> : vector<8xf32>
    %60 = vector.multi_reduction <maximumf>, %59, %cst_18 [1] : vector<8x8xf32> to vector<8xf32>
    %61 = vector.shape_cast %60 : vector<8xf32> to vector<8x1xf32>
    %62 = vector.broadcast %61 : vector<8x1xf32> to vector<8x8xf32>
    %63 = arith.subf %59, %62 : vector<8x8xf32>
    %64 = math.exp %63 : vector<8x8xf32>
    %cst_19 = arith.constant dense<0.000000e+00> : vector<8xf32>
    %65 = vector.multi_reduction <add>, %64, %cst_19 [1] : vector<8x8xf32> to vector<8xf32>
    %66 = vector.shape_cast %65 : vector<8xf32> to vector<8x1xf32>
    %67 = arith.truncf %64 : vector<8x8xf32> to vector<8x8xbf16>
    %cst_20 = arith.constant dense<0.000000e+00> : vector<8x8xf32>
    %68 = tpu.matmul %67, %58, %cst_20 {dimension_numbers = #tpu.dot_dimension_numbers<[1], [0], [0], [1], [0, 0, 1, 1], [], []>} : vector<8x8xbf16>, vector<8x8xbf16>, vector<8x8xf32> -> vector<8x8xf32>
    %69 = tpu.reciprocal %66 {approx = true} : vector<8x1xf32> -> vector<8x1xf32>
    %70 = vector.broadcast %69 : vector<8x1xf32> to vector<8x8xf32>
    %71 = arith.mulf %68, %70 : vector<8x8xf32>
    %72 = arith.truncf %71 : vector<8x8xf32> to vector<8x8xbf16>
    %c0_21 = arith.constant 0 : index
    %c24 = arith.constant 24 : index
    %73 = vector.load %arg6[%c0_21, %c24] : memref<8x32xbf16, #tpu.memory_space<vmem>>, vector<8x8xbf16>
    tpu.vector_store %arg6[%c0_21, %c24], %72 {strides = array<i32>} : memref<8x32xbf16, #tpu.memory_space<vmem>>, vector<8x8xbf16>,
    %c0_22 = arith.constant 0 : index
    %c0_23 = arith.constant 0 : index
    %74 = vector.load %arg6[%c0_22, %c0_23] : memref<8x32xbf16, #tpu.memory_space<vmem>>, vector<8x32xbf16>
    %c0_24 = arith.constant 0 : index
    %c0_25 = arith.constant 0 : index
    %75 = vector.load %arg3[%c0_24, %c0_25] : memref<32x32xbf16, #tpu.memory_space<vmem>>, vector<32x32xbf16>
    %cst_26 = arith.constant dense<0.000000e+00> : vector<8x32xf32>
    %76 = tpu.matmul %74, %75, %cst_26 {dimension_numbers = #tpu.dot_dimension_numbers<[1], [0], [0], [1], [0, 0, 1, 1], [], []>} : vector<8x32xbf16>, vector<32x32xbf16>, vector<8x32xf32> -> vector<8x32xf32>
    %c0_27 = arith.constant 0 : index
    %c0_28 = arith.constant 0 : index
    %c0_29 = arith.constant 0 : index
    %77 = vector.load %arg2[%c0_27, %c0_28, %c0_29] : memref<1x8x32xf32, #tpu.memory_space<vmem>>, vector<1x8x32xf32>
    %78 = vector.shape_cast %77 : vector<1x8x32xf32> to vector<8x32xf32>
    %79 = arith.addf %78, %76 : vector<8x32xf32>
    %c0_30 = arith.constant 0 : index
    %c0_31 = arith.constant 0 : index
    %80 = vector.load %arg4[%c0_30, %c0_31] : memref<1x32xf32, #tpu.memory_space<vmem>>, vector<1x32xf32>
    %81 = vector.broadcast %80 : vector<1x32xf32> to vector<8x32xf32>
    %82 = arith.addf %79, %81 : vector<8x32xf32>
    %c0_32 = arith.constant 0 : index
    %c0_33 = arith.constant 0 : index
    %c0_34 = arith.constant 0 : index
    %83 = vector.load %arg5[%c0_32, %c0_33, %c0_34] : memref<1x8x32xf32, #tpu.memory_space<vmem>>, vector<1x8x32xf32>
    %84 = vector.shape_cast %83 : vector<1x8x32xf32> to vector<8x32xf32>
    %85 = vector.shape_cast %82 : vector<8x32xf32> to vector<1x8x32xf32>
    tpu.vector_store %arg5[%c0_32, %c0_33, %c0_34], %85 {strides = array<i32>} : memref<1x8x32xf32, #tpu.memory_space<vmem>>, vector<1x8x32xf32>,
    return
  }
  func.func @transform_0(%arg0: i32) -> (i32, i32, i32) {
    %c0_i32 = arith.constant 0 : i32
    %c0_i32_0 = arith.constant 0 : i32
    %c0_i32_1 = arith.constant 0 : i32
    return %arg0, %c0_i32, %c0_i32_0 : i32, i32, i32
  }
  func.func @transform_1(%arg0: i32) -> (i32, i32, i32) {
    %c0_i32 = arith.constant 0 : i32
    %c0_i32_0 = arith.constant 0 : i32
    %c0_i32_1 = arith.constant 0 : i32
    return %arg0, %c0_i32, %c0_i32_0 : i32, i32, i32
  }
  func.func @transform_2(%arg0: i32) -> (i32, i32) {
    %c0_i32 = arith.constant 0 : i32
    %c0_i32_0 = arith.constant 0 : i32
    %c0_i32_1 = arith.constant 0 : i32
    return %c0_i32, %c0_i32_0 : i32, i32
  }
  func.func @transform_3(%arg0: i32) -> (i32, i32) {
    %c0_i32 = arith.constant 0 : i32
    %c0_i32_0 = arith.constant 0 : i32
    %c0_i32_1 = arith.constant 0 : i32
    return %c0_i32, %c0_i32_0 : i32, i32
  }
  func.func @transform_4(%arg0: i32) -> (i32, i32, i32) {
    %c0_i32 = arith.constant 0 : i32
    %c0_i32_0 = arith.constant 0 : i32
    %c0_i32_1 = arith.constant 0 : i32
    return %arg0, %c0_i32, %c0_i32_0 : i32, i32, i32
  }
}

</mosaic_0001>

<llo_original>
// kernel: self_attention_block.2
$region0: #{self_attention_block.2}
  #allocation0 [shape = 'u32[]', space=smem, size = 0x4, offset = 0x4, fixed_abs, tag = 'smem constant byte address 0x4 - core index']
  #allocation1 [shape = 'u32[144,128]{1,0:T(1,128)}', space=vmem, size = 0x12000, scoped, tag = 'internal scratch']
  %s0 = inlined_call_operand.hbm [shape: f32[16,32], index: 0, kind: input, shape index: {}]
  %s1 = inlined_call_operand.vmem [shape: f32[1,32], index: 1, kind: input, shape index: {}]
  %s2 = inlined_call_operand.vmem [shape: f32[1,32], index: 2, kind: input, shape index: {}]
  %s3 = inlined_call_operand.hbm [shape: bf16[32,96], index: 3, kind: input, shape index: {}]
  %s4 = inlined_call_operand.vmem [shape: f32[1,96], index: 4, kind: input, shape index: {}]
  %s5 = inlined_call_operand.vmem [shape: bf16[16,96], index: 5, kind: output, shape index: {}]
  %s6 = sld [smem:[#allocation0]]
  $region38: #{self_attention_block.2} parent=0
    _
  %s8 = ssub.s32 1, %s6
  %s9 = scalar_select 0, %s8, %s6
  $region1: #{self_attention_block.2} parent=0
    #allocation2 [shape = 'u8[8192]{0}', space=vmem, size = 0x2000, scoped, tag = 'input window, operand 0, single buffered']
    #allocation3 [shape = 's32[1]{0}', space=sflag, size = 0x4, scoped, tag = 'scoped memory for self_attention_block.2']
    #allocation4 [shape = 'u8[8192]{0}', space=vmem, size = 0x2000, scoped, tag = 'input window, operand 3, single buffered']
    #allocation5 [shape = 's32[1]{0}', space=sflag, size = 0x4, scoped, tag = 'scoped memory for self_attention_block.2']
    %10 = vsyncpa [#allocation3], 0
    %11 = vsyncpa [#allocation5], 0
    // Predicated region
    $region2: #{self_attention_block.2} parent=1 // pred_check
      _
    $region3: #{self_attention_block.2} parent=1 // pred_check_branch
      %13 = sbr.rel (0) target = $region5
    $region4: #{self_attention_block.2} parent=1 // pred_region
      %s15 = ssub.s32 256, 256
      %16 = vsyncadd [#allocation3], %s15
      %s17 = sshll.u32 [#allocation2], 4
      %s18 = int_to_ptr.vmem [resolvable:$true] %s17
      %23 = dma.hbm_to_vmem [thread:$0]  %s0, 256, %s18, [#allocation3], 128, 128, 8
    $region5: #{self_attention_block.2} parent=1 // pred_fallthru
      _
    // Predicated region
    $region6: #{self_attention_block.2} parent=1 // pred_check
      _
    $region7: #{self_attention_block.2} parent=1 // pred_check_branch
      %25 = sbr.rel (0) target = $region9
    $region8: #{self_attention_block.2} parent=1 // pred_region
      _
    $region9: #{self_attention_block.2} parent=1 // pred_fallthru
      _
    // Predicated region
    $region10: #{self_attention_block.2} parent=1 // pred_check
      _
    $region11: #{self_attention_block.2} parent=1 // pred_check_branch
      %27 = sbr.rel (0) target = $region13
    $region12: #{self_attention_block.2} parent=1 // pred_region
      _
    $region13: #{self_attention_block.2} parent=1 // pred_fallthru
      _
    // Predicated region
    $region14: #{self_attention_block.2} parent=1 // pred_check
      _
    $region15: #{self_attention_block.2} parent=1 // pred_check_branch
      %29 = sbr.rel (0) target = $region17
    $region16: #{self_attention_block.2} parent=1 // pred_region
      %s31 = ssub.s32 256, 256
      %32 = vsyncadd [#allocation5], %s31
      %s33 = sshll.u32 [#allocation4], 4
      %s34 = int_to_ptr.vmem [resolvable:$true] %s33
      %39 = dma.hbm_to_vmem [thread:$0]  %s3, 256, %s34, [#allocation5], 64, 64, 4
    $region17: #{self_attention_block.2} parent=1 // pred_fallthru
      _
    // Predicated region
    $region18: #{self_attention_block.2} parent=1 // pred_check
      _
    $region19: #{self_attention_block.2} parent=1 // pred_check_branch
      %41 = sbr.rel (0) target = $region21
    $region20: #{self_attention_block.2} parent=1 // pred_region
      _
    $region21: #{self_attention_block.2} parent=1 // pred_fallthru
      _
    // Predicated region
    $region22: #{self_attention_block.2} parent=1 // pred_check
      _
    $region23: #{self_attention_block.2} parent=1 // pred_check_branch
      %43 = sbr.rel (0) target = $region25
    $region24: #{self_attention_block.2} parent=1 // pred_region
      %44 = dma.done [#allocation3], 256
    $region25: #{self_attention_block.2} parent=1 // pred_fallthru
      _
    // Predicated region
    $region26: #{self_attention_block.2} parent=1 // pred_check
      _
    $region27: #{self_attention_block.2} parent=1 // pred_check_branch
      %46 = sbr.rel (0) target = $region29
    $region28: #{self_attention_block.2} parent=1 // pred_region
      %47 = dma.done [#allocation5], 256
    $region29: #{self_attention_block.2} parent=1 // pred_fallthru
      _
    %v49 = vld [vmem:[#allocation2] sm:$0xff]
    %v50 = vld [vmem:[#allocation2 + $0x8] sm:$0xff]
    %vm51 = vcmask 261120
    %v52 = vsel %vm51, %v49, 0.0
    %53 = vadd.xlane.f32.xlu0 %v52
    %v54 = vpop.xlane.xlu0 %53
    %v55 = vsel %vm51, %v50, 0.0
    %56 = vadd.xlane.f32.xlu0 %v55
    %v57 = vpop.xlane.xlu0 %56
    %v58 = vrcp.pop 32.0
    %v59 = vmul.f32 %v54, %v58
    %v60 = vmul.f32 %v57, %v58
    %v61 = vsub.f32 %v49, %v59
    %v62 = vsub.f32 %v50, %v60
    %v63 = vmul.f32 %v61, %v61
    %v64 = vmul.f32 %v62, %v62
    %v65 = vsel %vm51, %v63, 0.0
    %66 = vadd.xlane.f32.xlu0 %v65
    %v67 = vpop.xlane.xlu0 %66
    %v68 = vsel %vm51, %v64, 0.0
    %69 = vadd.xlane.f32.xlu0 %v68
    %v70 = vpop.xlane.xlu0 %69
    %v71 = vmul.f32 %v67, %v58
    %v72 = vmul.f32 %v70, %v58
    %v73 = vadd.f32 %v71, 1e-05
    %v74 = vadd.f32 %v72, 1e-05
    %v75 = vrsqrt.pop %v73
    %v76 = vrsqrt.pop %v74
    %v77 = vmul.f32 %v61, %v75
    %v78 = vmul.f32 %v62, %v76
    %v79 = vld [vmem:[%s1] sm:$0x1]
    %v81 = vlaneseq
    %v82 = vshrl.u32 %v81, 7
    %v83 = vsub.s32 0, %v82
    %v84 = vrot.slane %v79, %v83
    %v86 = vmul.f32 %v77, %v84
    %v87 = vmul.f32 %v78, %v84
    %v88 = vld [vmem:[%s2] sm:$0x1]
    %v90 = vlaneseq
    %v91 = vshrl.u32 %v90, 7
    %v92 = vsub.s32 0, %v91
    %v93 = vrot.slane %v88, %v92
    %v95 = vadd.f32 %v86, %v93
    %v96 = vadd.f32 %v87, %v93
    %v97 = vpack.c.bf16 %v96, %v95
    %v98 = vld [vmem:[#allocation4] sm:$0xf]
    %v99 = vld [vmem:[#allocation4 + $0x4] sm:$0xf]
    %v100 = vld [vmem:[#allocation4 + $0x8] sm:$0xf]
    %v101 = vld [vmem:[#allocation4 + $0xc] sm:$0xf]
    %v102 = vld [vmem:[%s4] sm:$0x1]
    %v104 = vlaneseq
    %v105 = vshrl.u32 %v104, 7
    %v106 = vsub.s32 0, %v105
    %v107 = vrot.slane %v102, %v106
    %v113 = vunpack.c.l.b16 %v98
    %v114 = vunpack.c.l.b16 %v99
    %v115 = vunpack.c.l.b16 %v100
    %v116 = vunpack.c.l.b16 %v101
    %v117 = vpack.c.b16 %v114, %v113
    %v118 = vpack.c.b16 %v116, %v115
    %v122 = vsel %vm51, %v97, 0
    %124 = vmatprep.subr.bf16.mxu0 0
    %125 = vmatpush1.bf16.msra.mxu0 0
    %126 = vmatprep.subr.bf16.mxu0 0
    %127 = vmatpush1.bf16.msra.mxu0 0
    %128 = vmatprep.subr.bf16.mxu0 0
    %129 = vmatpush1.bf16.msra.mxu0 0
    %130 = vmatprep.subr.bf16.mxu0 0
    %131 = vmatpush1.bf16.msra.mxu0 0
    %132 = vmatprep.subr.bf16.mxu0 0
    %133 = vmatpush1.bf16.msra.mxu0 0
    %134 = vmatprep.subr.bf16.mxu0 0
    %135 = vmatpush1.bf16.msra.mxu0 0
    %136 = vmatprep.subr.bf16.mxu0 0
    %137 = vmatpush1.bf16.msra.mxu0 %v118
    %138 = vmatprep.subr.bf16.mxu0 0
    %139 = vmatpush1.bf16.msra.mxu0 %v117
    %140 = vmatprep.subr.bf16.mxu0 0
    %141 = vmatpush2.bf16.msra.mxu0 0
    %142 = vmatprep.subr.bf16.mxu0 0
    %143 = vmatpush2.bf16.msra.mxu0 0
    %144 = vmatprep.subr.bf16.mxu0 0
    %145 = vmatpush2.bf16.msra.mxu0 0
    %146 = vmatprep.subr.bf16.mxu0 0
    %147 = vmatpush2.bf16.msra.mxu0 0
    %148 = vmatprep.subr.bf16.mxu0 0
    %149 = vmatpush2.bf16.msra.mxu0 0
    %150 = vmatprep.subr.bf16.mxu0 0
    %151 = vmatpush2.bf16.msra.mxu0 0
    %152 = vmatprep.subr.bf16.mxu0 0
    %153 = vmatpush2.bf16.msra.mxu0 0
    %154 = vmatprep.subr.bf16.mxu0 0
    %155 = vmatpush2.bf16.msra.mxu0 0
    %156 = vmatprep.mubr.bf16.mxu0 0
    %157 = vmatmul.mubr.bf16.gmra.mxu0 %v122
    %v158 = vpop.f32.mrf.mxu0
    %v159 = vadd.f32 %v107, %v158
    %v160 = vpop.f32.mrf.mxu0
    %v161 = vpop.f32.mrf.mxu0
    %v162 = vadd.f32 %v107, %v161
    %v163 = vpop.f32.mrf.mxu0
    %164 = vdwg.mxu0
    %v165 = vpack.c.bf16 %v162, %v159
    %v167 = vunpack.c.l.b16 %v165
    %v168 = vunpack.c.h.b16 %v165
    %v169 = vpack.c.b16 %v167, %v167
    %v170 = vpack.c.b16 %v168, %v168
    %vm173 = vcmask 781312
    %174 = vst.msk [vmem:[%s5] sm:$0xf] %vm173, %v169
    %175 = vst.msk [vmem:[%s5 + $0x4] sm:$0xf] %vm173, %v170
    // Predicated region
    $region30: #{self_attention_block.2} parent=1 // pred_check
      _
    $region31: #{self_attention_block.2} parent=1 // pred_check_branch
      %177 = sbr.rel (0) target = $region33
    $region32: #{self_attention_block.2} parent=1 // pred_region
      _
    $region33: #{self_attention_block.2} parent=1 // pred_fallthru
      _
    // Predicated region
    $region34: #{self_attention_block.2} parent=1 // pred_check
      _
    $region35: #{self_attention_block.2} parent=1 // pred_check_branch
      %179 = sbr.rel (0) target = $region37
    $region36: #{self_attention_block.2} parent=1 // pred_region
      _
    $region37: #{self_attention_block.2} parent=1 // pred_fallthru
      _
    %180 = vsyncpa [#allocation3], 1
    %181 = vsyncpa [#allocation5], 1

// kernel: self_attention_block.3
$region0: #{self_attention_block.3}
  #allocation0 [shape = 'u32[]', space=smem, size = 0x4, offset = 0x4, fixed_abs, tag = 'smem constant byte address 0x4 - core index']
  #allocation1 [shape = 'u32[144,128]{1,0:T(1,128)}', space=vmem, size = 0x12000, scoped, tag = 'internal scratch']
  #allocation2 [shape = 'bf16[8,32]{1,0:T(8,128)(2,1)}', space=vmem, size = 0x800, scoped, tag = 'scratch operand']
  %s0 = inlined_call_operand.vmem [shape: bf16[2,8,96], index: 0, kind: input, shape index: {}]
  %s1 = inlined_call_operand.vmem [shape: f32[2,8,32], index: 1, kind: input, shape index: {}]
  %s2 = inlined_call_operand.vmem [shape: bf16[32,32], index: 2, kind: input, shape index: {}]
  %s3 = inlined_call_operand.vmem [shape: f32[1,32], index: 3, kind: input, shape index: {}]
  %s4 = inlined_call_operand.hbm [shape: f32[2,8,32], index: 4, kind: output, shape index: {}]
  %s5 = sld [smem:[#allocation0]]
  $region49: #{self_attention_block.3} parent=0
    _
  %s7 = ssub.s32 1, %s5
  %s8 = scalar_select 0, %s7, %s5
  $region1: #{self_attention_block.3} parent=0
    #allocation3 [shape = 'u8[8192]{0}', space=vmem, size = 0x2000, scoped, tag = 'output window, operand 0']
    #allocation4 [shape = 's32[2]{0}', space=sflag, size = 0x8, scoped, tag = 'scoped memory for self_attention_block.3']
    %9 = vsyncpa [#allocation4], 0
    %s10 = scalar_lea.sflag [#allocation4], 1
    %11 = vsyncpa %s10, 0
    loop: start=0, step=1, limit=4
    $region2: #{self_attention_block.3} parent=1 // loop_pre_header
      _
    $region3: #{self_attention_block.3} parent=1 // loop_header
      %s13 = sphi 0, %s17
      %p14 = scmp.ge.s32.totalorder %s13, 4
      %s23 = sphi 0, %s25
      %s26 = sphi 0, %s23
      %s27 = sphi 0, %s26
      %s43 = sphi 0, %s27
      %s49 = sphi 0, %s51
      %s52 = sphi 0, %s49
      %s53 = sphi 0, %s52
      %s69 = sphi 0, %s53
      %s73 = sphi 0, %s73
      %s75 = sphi 0, %s73
      %s76 = sphi 0, %s75
      %s90 = sphi 0, %s76
      %s94 = sphi 0, %s94
      %s96 = sphi 0, %s94
      %s97 = sphi 0, %s96
      %s111 = sphi 0, %s97
      %s117 = sphi 0, %s119
      %s120 = sphi 0, %s117
      %s121 = sphi 0, %s120
      %s137 = sphi 0, %s121
    $region4: #{self_attention_block.3} parent=1 // loop_header_branch
      %16 = sbr.rel (%p14) target = $region8
    $region5: #{self_attention_block.3} parent=1 // loop_body
      %s18 = ssub.s32 %s13, 1
      %s19 = ssub.s32 %s13, 2
      %s20 = sadd.s32 %s13, 1
      %s21 = ssub.s32 %s13, %s20
      %p22 = scmp.eq.s32.totalorder %s21, 0
      %s24 = sadd.s32 %s23, 1
      %s25 = scalar_select %p22, %s23, %s24
      %p28 = pneg %p22
      %p29 = scmp.eq.s32.totalorder %s13, 1
      %p30 = por %p28, %p29
      %p31 = scmp.ne.s32.totalorder %s23, %s26
      %p32 = scmp.eq.s32.totalorder %s13, 0
      %p33 = por %p31, %p32
      %p34 = scmp.ne.s32.totalorder %s23, %s26
      %p35 = scmp.eq.s32.totalorder %s18, 1
      %p36 = por %p34, %p35
      %p37 = scmp.ne.s32.totalorder %s26, %s27
      %p38 = scmp.eq.s32.totalorder %s18, 0
      %p39 = por %p37, %p38
      %p40 = scmp.ne.s32.totalorder %s26, %s27
      %p41 = scmp.eq.s32.totalorder %s19, 1
      %p42 = por %p40, %p41
      %p44 = scmp.ne.s32.totalorder %s27, %s43
      %p45 = scmp.eq.s32.totalorder %s19, 0
      %p46 = por %p44, %p45
      %s47 = ssub.s32 %s13, %s20
      %p48 = scmp.eq.s32.totalorder %s47, 0
      %s50 = sadd.s32 %s49, 1
      %s51 = scalar_select %p48, %s49, %s50
      %p54 = pneg %p48
      %p55 = scmp.eq.s32.totalorder %s13, 1
      %p56 = por %p54, %p55
      %p57 = scmp.ne.s32.totalorder %s49, %s52
      %p58 = scmp.eq.s32.totalorder %s13, 0
      %p59 = por %p57, %p58
      %p60 = scmp.ne.s32.totalorder %s49, %s52
      %p61 = scmp.eq.s32.totalorder %s18, 1
      %p62 = por %p60, %p61
      %p63 = scmp.ne.s32.totalorder %s52, %s53
      %p64 = scmp.eq.s32.totalorder %s18, 0
      %p65 = por %p63, %p64
      %p66 = scmp.ne.s32.totalorder %s52, %s53
      %p67 = scmp.eq.s32.totalorder %s19, 1
      %p68 = por %p66, %p67
      %p70 = scmp.ne.s32.totalorder %s53, %s69
      %p71 = scmp.eq.s32.totalorder %s19, 0
      %p72 = por %p70, %p71
      %s74 = sadd.s32 %s73, 1
      %p77 = scmp.eq.s32.totalorder %s13, 1
      %p78 = scmp.ne.s32.totalorder %s73, %s75
      %p79 = scmp.eq.s32.totalorder %s13, 0
      %p80 = por %p78, %p79
      %p81 = scmp.ne.s32.totalorder %s73, %s75
      %p82 = scmp.eq.s32.totalorder %s18, 1
      %p83 = por %p81, %p82
      %p84 = scmp.ne.s32.totalorder %s75, %s76
      %p85 = scmp.eq.s32.totalorder %s18, 0
      %p86 = por %p84, %p85
      %p87 = scmp.ne.s32.totalorder %s75, %s76
      %p88 = scmp.eq.s32.totalorder %s19, 1
      %p89 = por %p87, %p88
      %p91 = scmp.ne.s32.totalorder %s76, %s90
      %p92 = scmp.eq.s32.totalorder %s19, 0
      %p93 = por %p91, %p92
      %s95 = sadd.s32 %s94, 1
      %p98 = scmp.eq.s32.totalorder %s13, 1
      %p99 = scmp.ne.s32.totalorder %s94, %s96
      %p100 = scmp.eq.s32.totalorder %s13, 0
      %p101 = por %p99, %p100
      %p102 = scmp.ne.s32.totalorder %s94, %s96
      %p103 = scmp.eq.s32.totalorder %s18, 1
      %p104 = por %p102, %p103
      %p105 = scmp.ne.s32.totalorder %s96, %s97
      %p106 = scmp.eq.s32.totalorder %s18, 0
      %p107 = por %p105, %p106
      %p108 = scmp.ne.s32.totalorder %s96, %s97
      %p109 = scmp.eq.s32.totalorder %s19, 1
      %p110 = por %p108, %p109
      %p112 = scmp.ne.s32.totalorder %s97, %s111
      %p113 = scmp.eq.s32.totalorder %s19, 0
      %p114 = por %p112, %p113
      %s115 = ssub.s32 %s13, %s20
      %p116 = scmp.eq.s32.totalorder %s115, 0
      %s118 = sadd.s32 %s117, 1
      %s119 = scalar_select %p116, %s117, %s118
      %p122 = pneg %p116
      %p123 = scmp.eq.s32.totalorder %s13, 1
      %p124 = por %p122, %p123
      %p125 = scmp.ne.s32.totalorder %s117, %s120
      %p126 = scmp.eq.s32.totalorder %s13, 0
      %p127 = por %p125, %p126
      %p128 = scmp.ne.s32.totalorder %s117, %s120
      %p129 = scmp.eq.s32.totalorder %s18, 1
      %p130 = por %p128, %p129
      %p131 = scmp.ne.s32.totalorder %s120, %s121
      %p132 = scmp.eq.s32.totalorder %s18, 0
      %p133 = por %p131, %p132
      %p134 = scmp.ne.s32.totalorder %s120, %s121
      %p135 = scmp.eq.s32.totalorder %s19, 1
      %p136 = por %p134, %p135
      %p138 = scmp.ne.s32.totalorder %s121, %s137
      %p139 = scmp.eq.s32.totalorder %s19, 0
      %p140 = por %p138, %p139
      %p141 = scmp.le.s32.totalorder 1, %s13
      %p142 = scmp.lt.s32.totalorder %s13, 3
      %p143 = pnand %p141, %p142
      %p144 = pneg %p143
      // Predicated region
      $region9: #{self_attention_block.3} parent=5 // pred_check
        _
      $region10: #{self_attention_block.3} parent=5 // pred_check_branch
        %146 = sbr.rel (%p143) target = $region12
      $region11: #{self_attention_block.3} parent=5 // pred_region
        %s147 = ssub.s32 %s13, 1
        // Predicated region
        $region13: #{self_attention_block.3} parent=11 // pred_check
          %p148 = pneg %p86
        $region14: #{self_attention_block.3} parent=11 // pred_check_branch
          %150 = sbr.rel (%p148) target = $region16
        $region15: #{self_attention_block.3} parent=11 // pred_region
          _
        $region16: #{self_attention_block.3} parent=11 // pred_fallthru
          _
        // Predicated region
        $region17: #{self_attention_block.3} parent=11 // pred_check
          %p151 = pneg %p107
        $region18: #{self_attention_block.3} parent=11 // pred_check_branch
          %153 = sbr.rel (%p151) target = $region20
        $region19: #{self_attention_block.3} parent=11 // pred_region
          _
        $region20: #{self_attention_block.3} parent=11 // pred_fallthru
          _
      $region12: #{self_attention_block.3} parent=5 // pred_fallthru
        _
      %p154 = scmp.lt.s32.totalorder %s13, 2
      // Predicated region
      $region21: #{self_attention_block.3} parent=5 // pred_check
        %p155 = pneg %p154
      $region22: #{self_attention_block.3} parent=5 // pred_check_branch
        %157 = sbr.rel (%p155) target = $region24
      $region23: #{self_attention_block.3} parent=5 // pred_region
        // Predicated region
        $region25: #{self_attention_block.3} parent=23 // pred_check
          %p158 = pneg %p33
        $region26: #{self_attention_block.3} parent=23 // pred_check_branch
          %160 = sbr.rel (%p158) target = $region28
        $region27: #{self_attention_block.3} parent=23 // pred_region
          %p161 = scmp.lt.s32.totalorder %s13, 1
          %s162 = scalar_select %p161, %s13, 1
          %s163 = smul.addr %s162, 4
          %s164 = scalar_lea.vmem %s0, %s163
        $region28: #{self_attention_block.3} parent=23 // pred_fallthru
          _
        // Predicated region
        $region29: #{self_attention_block.3} parent=23 // pred_check
          %p165 = pneg %p59
        $region30: #{self_attention_block.3} parent=23 // pred_check_branch
          %167 = sbr.rel (%p165) target = $region32
        $region31: #{self_attention_block.3} parent=23 // pred_region
          %p168 = scmp.lt.s32.totalorder %s13, 1
          %s169 = scalar_select %p168, %s13, 1
          %s170 = smul.addr %s169, 8
          %s171 = scalar_lea.vmem %s1, %s170
        $region32: #{self_attention_block.3} parent=23 // pred_fallthru
          _
      $region24: #{self_attention_block.3} parent=5 // pred_fallthru
        _
      %p172 = scmp.le.s32.totalorder 1, %s13
      %p173 = scmp.lt.s32.totalorder %s13, 3
      %p174 = pnand %p172, %p173
      %p175 = pneg %p174
      // Predicated region
      $region33: #{self_attention_block.3} parent=5 // pred_check
        _
      $region34: #{self_attention_block.3} parent=5 // pred_check_branch
        %177 = sbr.rel (%p174) target = $region36
      $region35: #{self_attention_block.3} parent=5 // pred_region
        %s178 = ssub.s32 %s13, 1
        %p179 = scmp.lt.s32.totalorder %s18, 1
        %s180 = scalar_select %p179, %s18, 1
        %s181 = smul.addr %s180, 4
        %s182 = scalar_lea.vmem %s0, %s181
        %p183 = pneg %p39
        %p184 = pneg %p36
        %p185 = scmp.lt.s32.totalorder %s18, 1
        %s186 = scalar_select %p185, %s18, 1
        %s187 = smul.addr %s186, 8
        %s188 = scalar_lea.vmem %s1, %s187
        %p189 = pneg %p65
        %p190 = pneg %p62
        %p191 = pneg %p86
        %p192 = pneg %p83
        %p193 = pneg %p107
        %p194 = pneg %p104
        %p195 = pneg %p133
        %p196 = pneg %p130
        %s197 = sand.u32 %s120, 1
        %s198 = scalar_lea.sflag [#allocation4], %s197
        %s199 = sand.u32 %s120, 1
        %s200 = smul.addr %s199, 8
        %s201 = scalar_lea.vmem [#allocation3], %s200
        %p202 = scmp.lt.s32.totalorder %s18, 1
        %s203 = scalar_select %p202, %s18, 1
        %s204 = smul.addr %s203, 4
        %s205 = scalar_lea.vmem %s0, %s204
        %p206 = scmp.lt.s32.totalorder %s18, 1
        %s207 = scalar_select %p206, %s18, 1
        %s208 = smul.addr %s207, 8
        %s209 = scalar_lea.vmem %s1, %s208
        %v211 = vld [vmem:[%s205] sm:$0xf]
        %v213 = vunpack.c.l.b16 %v211
        %v214 = vpack.c.b16 %v213, %v213
        %215 = vrot.lane.b32.xlu0 %v214, 96
        %v216 = vpop.permute.xlu0 %215
        %vm217 = vcmask 64512
        %v219 = vsel %vm217, %v211, 0
        %v222 = vsel %vm217, %v216, 0
        %224 = vmatprep.subr.bf16.mxu0 0
        %225 = vmatpush1.bf16.xpose.msra.mxu0 0
        %226 = vmatprep.subr.bf16.mxu0 0
        %227 = vmatpush1.bf16.xpose.msra.mxu0 0
        %228 = vmatprep.subr.bf16.mxu0 0
        %229 = vmatpush1.bf16.xpose.msra.mxu0 0
        %230 = vmatprep.subr.bf16.mxu0 0
        %231 = vmatpush1.bf16.xpose.msra.mxu0 0
        %232 = vmatprep.subr.bf16.mxu0 0
        %233 = vmatpush1.bf16.xpose.msra.mxu0 0
        %234 = vmatprep.subr.bf16.mxu0 0
        %235 = vmatpush1.bf16.xpose.msra.mxu0 0
        %236 = vmatprep.subr.bf16.mxu0 0
        %237 = vmatpush1.bf16.xpose.msra.mxu0 0
        %238 = vmatprep.subr.bf16.mxu0 0
        %239 = vmatpush1.bf16.xpose.msra.mxu0 %v222
        %240 = vmatprep.subr.bf16.mxu0 0
        %241 = vmatpush2.bf16.xpose.msra.mxu0 0
        %242 = vmatprep.subr.bf16.mxu0 0
        %243 = vmatpush2.bf16.xpose.msra.mxu0 0
        %244 = vmatprep.subr.bf16.mxu0 0
        %245 = vmatpush2.bf16.xpose.msra.mxu0 0
        %246 = vmatprep.subr.bf16.mxu0 0
        %247 = vmatpush2.bf16.xpose.msra.mxu0 0
        %248 = vmatprep.subr.bf16.mxu0 0
        %249 = vmatpush2.bf16.xpose.msra.mxu0 0
        %250 = vmatprep.subr.bf16.mxu0 0
        %251 = vmatpush2.bf16.xpose.msra.mxu0 0
        %252 = vmatprep.subr.bf16.mxu0 0
        %253 = vmatpush2.bf16.xpose.msra.mxu0 0
        %254 = vmatprep.subr.bf16.mxu0 0
        %255 = vmatpush2.bf16.xpose.msra.mxu0 0
        %256 = vmatprep.mubr.bf16.mxu0 0
        %257 = vmatmul.mubr.bf16.gmra.mxu0 %v219
        %v258 = vpop.f32.mrf.mxu0
        %v259 = vadd.f32 0.0, %v258
        %v260 = vpop.f32.mrf.mxu0
        %v261 = vpop.f32.mrf.mxu0
        %v262 = vpop.f32.mrf.mxu0
        %263 = vdwg.mxu0
        %v264 = vsel %vm217, %v259, -inf
        %265 = vmax.xlane.f32.xlu0 %v264
        %v266 = vpop.xlane.xlu0 %265
        %v267 = vsub.f32 %v259, %v266
        %v268 = vmul.f32 %v267, 1.442695
        %v269 = vpow.pop %v268
        %v270 = vsel %vm217, %v269, 0.0
        %271 = vadd.xlane.f32.xlu0 %v270
        %v272 = vpop.xlane.xlu0 %271
        %v273 = vpack.c.bf16 %v269, %v269
        %274 = vrot.lane.b32.xlu0 %v214, 64
        %v275 = vpop.permute.xlu0 %274
        %v277 = vsel %vm217, %v273, 0
        %vm279 = vcmask 1043456
        %v281 = vsel %vm279, %v275, 0
        %283 = vmatprep.subr.bf16.mxu0 0
        %284 = vmatpush1.bf16.msra.mxu0 0
        %285 = vmatprep.subr.bf16.mxu0 0
        %286 = vmatpush1.bf16.msra.mxu0 0
        %287 = vmatprep.subr.bf16.mxu0 0
        %288 = vmatpush1.bf16.msra.mxu0 0
        %289 = vmatprep.subr.bf16.mxu0 0
        %290 = vmatpush1.bf16.msra.mxu0 0
        %291 = vmatprep.subr.bf16.mxu0 0
        %292 = vmatpush1.bf16.msra.mxu0 0
        %293 = vmatprep.subr.bf16.mxu0 0
        %294 = vmatpush1.bf16.msra.mxu0 0
        %295 = vmatprep.subr.bf16.mxu0 0
        %296 = vmatpush1.bf16.msra.mxu0 0
        %297 = vmatprep.subr.bf16.mxu0 0
        %298 = vmatpush1.bf16.msra.mxu0 %v281
        %299 = vmatprep.subr.bf16.mxu0 0
        %300 = vmatpush2.bf16.msra.mxu0 0
        %301 = vmatprep.subr.bf16.mxu0 0
        %302 = vmatpush2.bf16.msra.mxu0 0
        %303 = vmatprep.subr.bf16.mxu0 0
        %304 = vmatpush2.bf16.msra.mxu0 0
        %305 = vmatprep.subr.bf16.mxu0 0
        %306 = vmatpush2.bf16.msra.mxu0 0
        %307 = vmatprep.subr.bf16.mxu0 0
        %308 = vmatpush2.bf16.msra.mxu0 0
        %309 = vmatprep.subr.bf16.mxu0 0
        %310 = vmatpush2.bf16.msra.mxu0 0
        %311 = vmatprep.subr.bf16.mxu0 0
        %312 = vmatpush2.bf16.msra.mxu0 0
        %313 = vmatprep.subr.bf16.mxu0 0
        %314 = vmatpush2.bf16.msra.mxu0 0
        %315 = vmatprep.mubr.bf16.mxu0 0
        %316 = vmatmul.mubr.bf16.gmra.mxu0 %v277
        %v317 = vpop.f32.mrf.mxu0
        %v318 = vadd.f32 0.0, %v317
        %v319 = vpop.f32.mrf.mxu0
        %v320 = vpop.f32.mrf.mxu0
        %v321 = vpop.f32.mrf.mxu0
        %322 = vdwg.mxu0
        %v323 = vrcp.pop %v272
        %v324 = vmul.f32 %v318, %v323
        %v325 = vpack.c.bf16 %v324, %v324
        %vm326 = vcmask 60416
        %327 = vst.msk [vmem:[#allocation2] sm:$0xf] %vm326, %v325
        %328 = vrot.lane.b32.xlu0 %v214, 120
        %v329 = vpop.permute.xlu0 %328
        %330 = vrot.lane.b32.xlu0 %v214, 88
        %v331 = vpop.permute.xlu0 %330
        %v333 = vsel %vm217, %v329, 0
        %v336 = vsel %vm217, %v331, 0
        %338 = vmatprep.subr.bf16.mxu0 0
        %339 = vmatpush1.bf16.xpose.msra.mxu0 0
        %340 = vmatprep.subr.bf16.mxu0 0
        %341 = vmatpush1.bf16.xpose.msra.mxu0 0
        %342 = vmatprep.subr.bf16.mxu0 0
        %343 = vmatpush1.bf16.xpose.msra.mxu0 0
        %344 = vmatprep.subr.bf16.mxu0 0
        %345 = vmatpush1.bf16.xpose.msra.mxu0 0
        %346 = vmatprep.subr.bf16.mxu0 0
        %347 = vmatpush1.bf16.xpose.msra.mxu0 0
        %348 = vmatprep.subr.bf16.mxu0 0
        %349 = vmatpush1.bf16.xpose.msra.mxu0 0
        %350 = vmatprep.subr.bf16.mxu0 0
        %351 = vmatpush1.bf16.xpose.msra.mxu0 0
        %352 = vmatprep.subr.bf16.mxu0 0
        %353 = vmatpush1.bf16.xpose.msra.mxu0 %v336
        %354 = vmatprep.subr.bf16.mxu0 0
        %355 = vmatpush2.bf16.xpose.msra.mxu0 0
        %356 = vmatprep.subr.bf16.mxu0 0
        %357 = vmatpush2.bf16.xpose.msra.mxu0 0
        %358 = vmatprep.subr.bf16.mxu0 0
        %359 = vmatpush2.bf16.xpose.msra.mxu0 0
        %360 = vmatprep.subr.bf16.mxu0 0
        %361 = vmatpush2.bf16.xpose.msra.mxu0 0
        %362 = vmatprep.subr.bf16.mxu0 0
        %363 = vmatpush2.bf16.xpose.msra.mxu0 0
        %364 = vmatprep.subr.bf16.mxu0 0
        %365 = vmatpush2.bf16.xpose.msra.mxu0 0
        %366 = vmatprep.subr.bf16.mxu0 0
        %367 = vmatpush2.bf16.xpose.msra.mxu0 0
        %368 = vmatprep.subr.bf16.mxu0 0
        %369 = vmatpush2.bf16.xpose.msra.mxu0 0
        %370 = vmatprep.mubr.bf16.mxu0 0
        %371 = vmatmul.mubr.bf16.gmra.mxu0 %v333
        %v372 = vpop.f32.mrf.mxu0
        %v373 = vadd.f32 0.0, %v372
        %v374 = vpop.f32.mrf.mxu0
        %v375 = vpop.f32.mrf.mxu0
        %v376 = vpop.f32.mrf.mxu0
        %377 = vdwg.mxu0
        %v378 = vsel %vm217, %v373, -inf
        %379 = vmax.xlane.f32.xlu0 %v378
        %v380 = vpop.xlane.xlu0 %379
        %v381 = vsub.f32 %v373, %v380
        %v382 = vmul.f32 %v381, 1.442695
        %v383 = vpow.pop %v382
        %v384 = vsel %vm217, %v383, 0.0
        %385 = vadd.xlane.f32.xlu0 %v384
        %v386 = vpop.xlane.xlu0 %385
        %v387 = vpack.c.bf16 %v383, %v383
        %388 = vrot.lane.b32.xlu0 %v214, 56
        %v389 = vpop.permute.xlu0 %388
        %v391 = vsel %vm217, %v387, 0
        %v394 = vsel %vm279, %v389, 0
        %396 = vmatprep.subr.bf16.mxu0 0
        %397 = vmatpush1.bf16.msra.mxu0 0
        %398 = vmatprep.subr.bf16.mxu0 0
        %399 = vmatpush1.bf16.msra.mxu0 0
        %400 = vmatprep.subr.bf16.mxu0 0
        %401 = vmatpush1.bf16.msra.mxu0 0
        %402 = vmatprep.subr.bf16.mxu0 0
        %403 = vmatpush1.bf16.msra.mxu0 0
        %404 = vmatprep.subr.bf16.mxu0 0
        %405 = vmatpush1.bf16.msra.mxu0 0
        %406 = vmatprep.subr.bf16.mxu0 0
        %407 = vmatpush1.bf16.msra.mxu0 0
        %408 = vmatprep.subr.bf16.mxu0 0
        %409 = vmatpush1.bf16.msra.mxu0 0
        %410 = vmatprep.subr.bf16.mxu0 0
        %411 = vmatpush1.bf16.msra.mxu0 %v394
        %412 = vmatprep.subr.bf16.mxu0 0
        %413 = vmatpush2.bf16.msra.mxu0 0
        %414 = vmatprep.subr.bf16.mxu0 0
        %415 = vmatpush2.bf16.msra.mxu0 0
        %416 = vmatprep.subr.bf16.mxu0 0
        %417 = vmatpush2.bf16.msra.mxu0 0
        %418 = vmatprep.subr.bf16.mxu0 0
        %419 = vmatpush2.bf16.msra.mxu0 0
        %420 = vmatprep.subr.bf16.mxu0 0
        %421 = vmatpush2.bf16.msra.mxu0 0
        %422 = vmatprep.subr.bf16.mxu0 0
        %423 = vmatpush2.bf16.msra.mxu0 0
        %424 = vmatprep.subr.bf16.mxu0 0
        %425 = vmatpush2.bf16.msra.mxu0 0
        %426 = vmatprep.subr.bf16.mxu0 0
        %427 = vmatpush2.bf16.msra.mxu0 0
        %428 = vmatprep.mubr.bf16.mxu0 0
        %429 = vmatmul.mubr.bf16.gmra.mxu0 %v391
        %v430 = vpop.f32.mrf.mxu0
        %v431 = vadd.f32 0.0, %v430
        %v432 = vpop.f32.mrf.mxu0
        %v433 = vpop.f32.mrf.mxu0
        %v434 = vpop.f32.mrf.mxu0
        %435 = vdwg.mxu0
        %v436 = vrcp.pop %v386
        %v437 = vmul.f32 %v431, %v436
        %v438 = vpack.c.bf16 %v437, %v437
        %v440 = vunpack.c.l.b16 %v438
        %v441 = vpack.c.b16 %v440, %v440
        %442 = vrot.lane.b32.xlu0 %v441, 8
        %v443 = vpop.permute.xlu0 %442
        %vm445 = vcmask 126016
        %446 = vst.msk [vmem:[#allocation2] sm:$0xf] %vm445, %v443
        %447 = vrot.lane.b32.xlu0 %v214, 112
        %v448 = vpop.permute.xlu0 %447
        %449 = vrot.lane.b32.xlu0 %v214, 80
        %v450 = vpop.permute.xlu0 %449
        %v452 = vsel %vm217, %v448, 0
        %v455 = vsel %vm217, %v450, 0
        %457 = vmatprep.subr.bf16.mxu0 0
        %458 = vmatpush1.bf16.xpose.msra.mxu0 0
        %459 = vmatprep.subr.bf16.mxu0 0
        %460 = vmatpush1.bf16.xpose.msra.mxu0 0
        %461 = vmatprep.subr.bf16.mxu0 0
        %462 = vmatpush1.bf16.xpose.msra.mxu0 0
        %463 = vmatprep.subr.bf16.mxu0 0
        %464 = vmatpush1.bf16.xpose.msra.mxu0 0
        %465 = vmatprep.subr.bf16.mxu0 0
        %466 = vmatpush1.bf16.xpose.msra.mxu0 0
        %467 = vmatprep.subr.bf16.mxu0 0
        %468 = vmatpush1.bf16.xpose.msra.mxu0 0
        %469 = vmatprep.subr.bf16.mxu0 0
        %470 = vmatpush1.bf16.xpose.msra.mxu0 0
        %471 = vmatprep.subr.bf16.mxu0 0
        %472 = vmatpush1.bf16.xpose.msra.mxu0 %v455
        %473 = vmatprep.subr.bf16.mxu0 0
        %474 = vmatpush2.bf16.xpose.msra.mxu0 0
        %475 = vmatprep.subr.bf16.mxu0 0
        %476 = vmatpush2.bf16.xpose.msra.mxu0 0
        %477 = vmatprep.subr.bf16.mxu0 0
        %478 = vmatpush2.bf16.xpose.msra.mxu0 0
        %479 = vmatprep.subr.bf16.mxu0 0
        %480 = vmatpush2.bf16.xpose.msra.mxu0 0
        %481 = vmatprep.subr.bf16.mxu0 0
        %482 = vmatpush2.bf16.xpose.msra.mxu0 0
        %483 = vmatprep.subr.bf16.mxu0 0
        %484 = vmatpush2.bf16.xpose.msra.mxu0 0
        %485 = vmatprep.subr.bf16.mxu0 0
        %486 = vmatpush2.bf16.xpose.msra.mxu0 0
        %487 = vmatprep.subr.bf16.mxu0 0
        %488 = vmatpush2.bf16.xpose.msra.mxu0 0
        %489 = vmatprep.mubr.bf16.mxu0 0
        %490 = vmatmul.mubr.bf16.gmra.mxu0 %v452
        %v491 = vpop.f32.mrf.mxu0
        %v492 = vadd.f32 0.0, %v491
        %v493 = vpop.f32.mrf.mxu0
        %v494 = vpop.f32.mrf.mxu0
        %v495 = vpop.f32.mrf.mxu0
        %496 = vdwg.mxu0
        %v497 = vsel %vm217, %v492, -inf
        %498 = vmax.xlane.f32.xlu0 %v497
        %v499 = vpop.xlane.xlu0 %498
        %v500 = vsub.f32 %v492, %v499
        %v501 = vmul.f32 %v500, 1.442695
        %v502 = vpow.pop %v501
        %v503 = vsel %vm217, %v502, 0.0
        %504 = vadd.xlane.f32.xlu0 %v503
        %v505 = vpop.xlane.xlu0 %504
        %v506 = vpack.c.bf16 %v502, %v502
        %507 = vrot.lane.b32.xlu0 %v214, 48
        %v508 = vpop.permute.xlu0 %507
        %v510 = vsel %vm217, %v506, 0
        %v513 = vsel %vm279, %v508, 0
        %515 = vmatprep.subr.bf16.mxu0 0
        %516 = vmatpush1.bf16.msra.mxu0 0
        %517 = vmatprep.subr.bf16.mxu0 0
        %518 = vmatpush1.bf16.msra.mxu0 0
        %519 = vmatprep.subr.bf16.mxu0 0
        %520 = vmatpush1.bf16.msra.mxu0 0
        %521 = vmatprep.subr.bf16.mxu0 0
        %522 = vmatpush1.bf16.msra.mxu0 0
        %523 = vmatprep.subr.bf16.mxu0 0
        %524 = vmatpush1.bf16.msra.mxu0 0
        %525 = vmatprep.subr.bf16.mxu0 0
        %526 = vmatpush1.bf16.msra.mxu0 0
        %527 = vmatprep.subr.bf16.mxu0 0
        %528 = vmatpush1.bf16.msra.mxu0 0
        %529 = vmatprep.subr.bf16.mxu0 0
        %530 = vmatpush1.bf16.msra.mxu0 %v513
        %531 = vmatprep.subr.bf16.mxu0 0
        %532 = vmatpush2.bf16.msra.mxu0 0
        %533 = vmatprep.subr.bf16.mxu0 0
        %534 = vmatpush2.bf16.msra.mxu0 0
        %535 = vmatprep.subr.bf16.mxu0 0
        %536 = vmatpush2.bf16.msra.mxu0 0
        %537 = vmatprep.subr.bf16.mxu0 0
        %538 = vmatpush2.bf16.msra.mxu0 0
        %539 = vmatprep.subr.bf16.mxu0 0
        %540 = vmatpush2.bf16.msra.mxu0 0
        %541 = vmatprep.subr.bf16.mxu0 0
        %542 = vmatpush2.bf16.msra.mxu0 0
        %543 = vmatprep.subr.bf16.mxu0 0
        %544 = vmatpush2.bf16.msra.mxu0 0
        %545 = vmatprep.subr.bf16.mxu0 0
        %546 = vmatpush2.bf16.msra.mxu0 0
        %547 = vmatprep.mubr.bf16.mxu0 0
        %548 = vmatmul.mubr.bf16.gmra.mxu0 %v510
        %v549 = vpop.f32.mrf.mxu0
        %v550 = vadd.f32 0.0, %v549
        %v551 = vpop.f32.mrf.mxu0
        %v552 = vpop.f32.mrf.mxu0
        %v553 = vpop.f32.mrf.mxu0
        %554 = vdwg.mxu0
        %v555 = vrcp.pop %v505
        %v556 = vmul.f32 %v550, %v555
        %v557 = vpack.c.bf16 %v556, %v556
        %v559 = vunpack.c.l.b16 %v557
        %v560 = vpack.c.b16 %v559, %v559
        %561 = vrot.lane.b32.xlu0 %v560, 16
        %v562 = vpop.permute.xlu0 %561
        %vm564 = vcmask 191616
        %565 = vst.msk [vmem:[#allocation2] sm:$0xf] %vm564, %v562
        %566 = vrot.lane.b32.xlu0 %v214, 104
        %v567 = vpop.permute.xlu0 %566
        %568 = vrot.lane.b32.xlu0 %v214, 72
        %v569 = vpop.permute.xlu0 %568
        %v571 = vsel %vm217, %v567, 0
        %v574 = vsel %vm217, %v569, 0
        %576 = vmatprep.subr.bf16.mxu0 0
        %577 = vmatpush1.bf16.xpose.msra.mxu0 0
        %578 = vmatprep.subr.bf16.mxu0 0
        %579 = vmatpush1.bf16.xpose.msra.mxu0 0
        %580 = vmatprep.subr.bf16.mxu0 0
        %581 = vmatpush1.bf16.xpose.msra.mxu0 0
        %582 = vmatprep.subr.bf16.mxu0 0
        %583 = vmatpush1.bf16.xpose.msra.mxu0 0
        %584 = vmatprep.subr.bf16.mxu0 0
        %585 = vmatpush1.bf16.xpose.msra.mxu0 0
        %586 = vmatprep.subr.bf16.mxu0 0
        %587 = vmatpush1.bf16.xpose.msra.mxu0 0
        %588 = vmatprep.subr.bf16.mxu0 0
        %589 = vmatpush1.bf16.xpose.msra.mxu0 0
        %590 = vmatprep.subr.bf16.mxu0 0
        %591 = vmatpush1.bf16.xpose.msra.mxu0 %v574
        %592 = vmatprep.subr.bf16.mxu0 0
        %593 = vmatpush2.bf16.xpose.msra.mxu0 0
        %594 = vmatprep.subr.bf16.mxu0 0
        %595 = vmatpush2.bf16.xpose.msra.mxu0 0
        %596 = vmatprep.subr.bf16.mxu0 0
        %597 = vmatpush2.bf16.xpose.msra.mxu0 0
        %598 = vmatprep.subr.bf16.mxu0 0
        %599 = vmatpush2.bf16.xpose.msra.mxu0 0
        %600 = vmatprep.subr.bf16.mxu0 0
        %601 = vmatpush2.bf16.xpose.msra.mxu0 0
        %602 = vmatprep.subr.bf16.mxu0 0
        %603 = vmatpush2.bf16.xpose.msra.mxu0 0
        %604 = vmatprep.subr.bf16.mxu0 0
        %605 = vmatpush2.bf16.xpose.msra.mxu0 0
        %606 = vmatprep.subr.bf16.mxu0 0
        %607 = vmatpush2.bf16.xpose.msra.mxu0 0
        %608 = vmatprep.mubr.bf16.mxu0 0
        %609 = vmatmul.mubr.bf16.gmra.mxu0 %v571
        %v610 = vpop.f32.mrf.mxu0
        %v611 = vadd.f32 0.0, %v610
        %v612 = vpop.f32.mrf.mxu0
        %v613 = vpop.f32.mrf.mxu0
        %v614 = vpop.f32.mrf.mxu0
        %615 = vdwg.mxu0
        %v616 = vsel %vm217, %v611, -inf
        %617 = vmax.xlane.f32.xlu0 %v616
        %v618 = vpop.xlane.xlu0 %617
        %v619 = vsub.f32 %v611, %v618
        %v620 = vmul.f32 %v619, 1.442695
        %v621 = vpow.pop %v620
        %v622 = vsel %vm217, %v621, 0.0
        %623 = vadd.xlane.f32.xlu0 %v622
        %v624 = vpop.xlane.xlu0 %623
        %v625 = vpack.c.bf16 %v621, %v621
        %626 = vrot.lane.b32.xlu0 %v214, 40
        %v627 = vpop.permute.xlu0 %626
        %v629 = vsel %vm217, %v625, 0
        %v632 = vsel %vm279, %v627, 0
        %634 = vmatprep.subr.bf16.mxu0 0
        %635 = vmatpush1.bf16.msra.mxu0 0
        %636 = vmatprep.subr.bf16.mxu0 0
        %637 = vmatpush1.bf16.msra.mxu0 0
        %638 = vmatprep.subr.bf16.mxu0 0
        %639 = vmatpush1.bf16.msra.mxu0 0
        %640 = vmatprep.subr.bf16.mxu0 0
        %641 = vmatpush1.bf16.msra.mxu0 0
        %642 = vmatprep.subr.bf16.mxu0 0
        %643 = vmatpush1.bf16.msra.mxu0 0
        %644 = vmatprep.subr.bf16.mxu0 0
        %645 = vmatpush1.bf16.msra.mxu0 0
        %646 = vmatprep.subr.bf16.mxu0 0
        %647 = vmatpush1.bf16.msra.mxu0 0
        %648 = vmatprep.subr.bf16.mxu0 0
        %649 = vmatpush1.bf16.msra.mxu0 %v632
        %650 = vmatprep.subr.bf16.mxu0 0
        %651 = vmatpush2.bf16.msra.mxu0 0
        %652 = vmatprep.subr.bf16.mxu0 0
        %653 = vmatpush2.bf16.msra.mxu0 0
        %654 = vmatprep.subr.bf16.mxu0 0
        %655 = vmatpush2.bf16.msra.mxu0 0
        %656 = vmatprep.subr.bf16.mxu0 0
        %657 = vmatpush2.bf16.msra.mxu0 0
        %658 = vmatprep.subr.bf16.mxu0 0
        %659 = vmatpush2.bf16.msra.mxu0 0
        %660 = vmatprep.subr.bf16.mxu0 0
        %661 = vmatpush2.bf16.msra.mxu0 0
        %662 = vmatprep.subr.bf16.mxu0 0
        %663 = vmatpush2.bf16.msra.mxu0 0
        %664 = vmatprep.subr.bf16.mxu0 0
        %665 = vmatpush2.bf16.msra.mxu0 0
        %666 = vmatprep.mubr.bf16.mxu0 0
        %667 = vmatmul.mubr.bf16.gmra.mxu0 %v629
        %v668 = vpop.f32.mrf.mxu0
        %v669 = vadd.f32 0.0, %v668
        %v670 = vpop.f32.mrf.mxu0
        %v671 = vpop.f32.mrf.mxu0
        %v672 = vpop.f32.mrf.mxu0
        %673 = vdwg.mxu0
        %v674 = vrcp.pop %v624
        %v675 = vmul.f32 %v669, %v674
        %v676 = vpack.c.bf16 %v675, %v675
        %v678 = vunpack.c.l.b16 %v676
        %v679 = vpack.c.b16 %v678, %v678
        %680 = vrot.lane.b32.xlu0 %v679, 24
        %v681 = vpop.permute.xlu0 %680
        %vm683 = vcmask 257216
        %684 = vst.msk [vmem:[#allocation2] sm:$0xf] %vm683, %v681
        %v685 = vld [vmem:[#allocation2] sm:$0xf]
        %v686 = vld [vmem:[%s2] sm:$0xf]
        %v687 = vld [vmem:[%s2 + $0x4] sm:$0xf]
        %v688 = vld [vmem:[%s2 + $0x8] sm:$0xf]
        %v689 = vld [vmem:[%s2 + $0xc] sm:$0xf]
        %v694 = vunpack.c.l.b16 %v686
        %v695 = vunpack.c.l.b16 %v687
        %v696 = vunpack.c.l.b16 %v688
        %v697 = vunpack.c.l.b16 %v689
        %v698 = vpack.c.b16 %v695, %v694
        %v699 = vpack.c.b16 %v697, %v696
        %vm702 = vcmask 261120
        %v704 = vsel %vm702, %v685, 0
        %706 = vmatprep.subr.bf16.mxu0 0
        %707 = vmatpush1.bf16.msra.mxu0 0
        %708 = vmatprep.subr.bf16.mxu0 0
        %709 = vmatpush1.bf16.msra.mxu0 0
        %710 = vmatprep.subr.bf16.mxu0 0
        %711 = vmatpush1.bf16.msra.mxu0 0
        %712 = vmatprep.subr.bf16.mxu0 0
        %713 = vmatpush1.bf16.msra.mxu0 0
        %714 = vmatprep.subr.bf16.mxu0 0
        %715 = vmatpush1.bf16.msra.mxu0 0
        %716 = vmatprep.subr.bf16.mxu0 0
        %717 = vmatpush1.bf16.msra.mxu0 0
        %718 = vmatprep.subr.bf16.mxu0 0
        %719 = vmatpush1.bf16.msra.mxu0 %v699
        %720 = vmatprep.subr.bf16.mxu0 0
        %721 = vmatpush1.bf16.msra.mxu0 %v698
        %722 = vmatprep.subr.bf16.mxu0 0
        %723 = vmatpush2.bf16.msra.mxu0 0
        %724 = vmatprep.subr.bf16.mxu0 0
        %725 = vmatpush2.bf16.msra.mxu0 0
        %726 = vmatprep.subr.bf16.mxu0 0
        %727 = vmatpush2.bf16.msra.mxu0 0
        %728 = vmatprep.subr.bf16.mxu0 0
        %729 = vmatpush2.bf16.msra.mxu0 0
        %730 = vmatprep.subr.bf16.mxu0 0
        %731 = vmatpush2.bf16.msra.mxu0 0
        %732 = vmatprep.subr.bf16.mxu0 0
        %733 = vmatpush2.bf16.msra.mxu0 0
        %734 = vmatprep.subr.bf16.mxu0 0
        %735 = vmatpush2.bf16.msra.mxu0 0
        %736 = vmatprep.subr.bf16.mxu0 0
        %737 = vmatpush2.bf16.msra.mxu0 0
        %738 = vmatprep.mubr.bf16.mxu0 0
        %739 = vmatmul.mubr.bf16.gmra.mxu0 %v704
        %v740 = vpop.f32.mrf.mxu0
        %v741 = vadd.f32 0.0, %v740
        %v742 = vpop.f32.mrf.mxu0
        %v743 = vpop.f32.mrf.mxu0
        %v744 = vpop.f32.mrf.mxu0
        %745 = vdwg.mxu0
        %v746 = vld [vmem:[%s209] sm:$0xff]
        %v747 = vadd.f32 %v746, %v741
        %v748 = vld [vmem:[%s3] sm:$0x1]
        %v750 = vlaneseq
        %v751 = vshrl.u32 %v750, 7
        %v752 = vsub.s32 0, %v751
        %v753 = vrot.slane %v748, %v752
        %v755 = vadd.f32 %v747, %v753
        %756 = vst.msk [vmem:[%s201] sm:$0xff] %vm702, %v755
        %s757 = sand.u32 %s120, 1
        %s758 = scalar_lea.sflag [#allocation4], %s757
        %s759 = sand.u32 %s120, 1
        %s760 = smul.addr %s759, 8
        %s761 = scalar_lea.vmem [#allocation3], %s760
        // Predicated region
        $region37: #{self_attention_block.3} parent=35 // pred_check
          %p762 = pneg %p130
        $region38: #{self_attention_block.3} parent=35 // pred_check_branch
          %764 = sbr.rel (%p762) target = $region40
        $region39: #{self_attention_block.3} parent=35 // pred_region
          %s766 = ssub.s32 128, 128
          %767 = vsyncadd %s758, %s766
          %s768 = smul.addr %s18, 128
          %s769 = scalar_lea.hbm %s4, %s768
          %s771 = sshll.u32 %s761, 4
          %s772 = int_to_ptr.vmem [resolvable:$true] %s771
          %774 = dma.vmem_to_hbm [thread:$0]  %s772, 128, %s769, %s758
        $region40: #{self_attention_block.3} parent=35 // pred_fallthru
          _
      $region36: #{self_attention_block.3} parent=5 // pred_fallthru
        _
      %p775 = scmp.le.s32.totalorder 2, %s13
      // Predicated region
      $region41: #{self_attention_block.3} parent=5 // pred_check
        %p776 = pneg %p775
      $region42: #{self_attention_block.3} parent=5 // pred_check_branch
        %778 = sbr.rel (%p776) target = $region44
      $region43: #{self_attention_block.3} parent=5 // pred_region
        %s779 = ssub.s32 %s13, 2
        // Predicated region
        $region45: #{self_attention_block.3} parent=43 // pred_check
          %p780 = pneg %p136
        $region46: #{self_attention_block.3} parent=43 // pred_check_branch
          %782 = sbr.rel (%p780) target = $region48
        $region47: #{self_attention_block.3} parent=43 // pred_region
          %s783 = sand.u32 %s121, 1
          %s784 = scalar_lea.sflag [#allocation4], %s783
          %s785 = sand.u32 %s121, 1
          %s786 = smul.addr %s785, 8
          %s787 = scalar_lea.vmem [#allocation3], %s786
          %788 = dma.done %s784, 128
        $region48: #{self_attention_block.3} parent=43 // pred_fallthru
          _
      $region44: #{self_attention_block.3} parent=5 // pred_fallthru
        _
    $region6: #{self_attention_block.3} parent=1 // loop_footer
      %s17 = sadd.s32 1, %s13
    $region7: #{self_attention_block.3} parent=1 // loop_footer_branch
      %12 = sbr.rel target = $region3
    $region8: #{self_attention_block.3} parent=1 // loop_exit
      _
    %789 = vsyncpa [#allocation4], 1
    %s790 = scalar_lea.sflag [#allocation4], 1
    %791 = vsyncpa %s790, 1

</llo_original>
